<compile_context>
chip_gen: v7x
topology: tpu7x:2x2x1
jax: 0.10.0
libtpu: 0.0.40
codegen_flags: <defaults>
</compile_context>

<pallas_src>
import functools

import jax
import jax.numpy as jnp
from jax import lax
from jax.experimental import pallas as pl
from jax.experimental.pallas import tpu as pltpu

SCALE_POS = 0.2
SCALE_NEG = 40.0
THRESH = 0.5
MARGIN = 0.3
EPSILON = 1e-5


def _round_up(x, m):
    return (x + m - 1) // m * m


@functools.lru_cache(maxsize=None)
def _tpu_defaults():
    """(vmem_capacity_bytes, has_bf16_vpu) with conservative fallbacks."""
    vmem_cap = 64 << 20            # v7x per-TensorCore size: safe lower bound everywhere
    bf16_ok = True                 # v6e / v7x have a bf16 VPU and EUP
    try:
        info = pltpu.get_tpu_info()
        vmem_cap = int(getattr(info, "vmem_capacity_bytes", vmem_cap))
        ver = str(getattr(info, "chip_version", "")).upper()
        if "V5" in ver or "5E" in ver or "5P" in ver or "5LITE" in ver:
            bf16_ok = False        # v5e has no bf16 VPU/EUP -> keep the epilogue in f32
    except Exception:
        pass
    return vmem_cap, bf16_ok


@functools.lru_cache(maxsize=None)
def _buffered_supported():
    """Compile-only probe: does BlockSpec(pipeline_mode=pl.Buffered(1)) lower cleanly?"""
    if not hasattr(pl, "Buffered"):
        return False

    def _probe(x_ref, o_ref):
        o_ref[...] = x_ref[...]

    try:
        fn = pl.pallas_call(
            _probe,
            grid=(2,),
            in_specs=[pl.BlockSpec((8, 128), lambda i: (0, 0),
                                   pipeline_mode=pl.Buffered(1))],
            out_specs=pl.BlockSpec((8, 128), lambda i: (i, 0)),
            out_shape=jax.ShapeDtypeStruct((16, 128), jnp.float32),
        )
        jax.jit(fn).lower(jnp.zeros((8, 128), jnp.float32)).compile()
        return True
    except Exception:
        return False


def _ms_loss_kernel(keys_t_ref, lab_col_ref, lab_row_ref, q_ref, out_ref, *, ew_dtype):
    """One anchor-row tile: (TB, Dp) queries vs. all keys (resident as (Dp, Bp))."""
    i = pl.program_id(0)
    tb = q_ref.shape[0]
    align = tb & -tb                               # largest power-of-two divisor of tb
    row0 = pl.multiple_of(i * tb, align)

    # sim = q @ keys^T on the MXU, f32 accumulation.  Keys are stored pre-transposed
    # (Dp, Bp) so the contraction is (1, 0) -- no per-step in-kernel key transpose.
    sim = lax.dot_general(
        q_ref[...], keys_t_ref[...],
        dimension_numbers=(((1,), (0,)), ((), ())),
        preferred_element_type=jnp.float32,
    )                                              # (TB, Bp) f32

    lab_q = lab_col_ref[pl.ds(row0, tb), :]        # (TB, 1) int32, sliced from resident col
    lab_k = lab_row_ref[...]                       # (1, Bp) int32
    same = lab_q == lab_k                          # (TB, Bp)
    row_valid = lab_q >= 0                         # (TB, 1)  real (non-padded) anchors
    col_valid = lab_k >= 0                         # (1, Bp)  real (non-padded) keys

    # Explicit diagonal mask: with a bf16 matmul self-similarity is not exactly 1.0,
    # so the value filter alone could re-admit self pairs.
    rows = row0 + lax.broadcasted_iota(jnp.int32, sim.shape, 0)
    cols = lax.broadcasted_iota(jnp.int32, sim.shape, 1)
    not_self = rows != cols

    # pos_pair_: same label, not self, sim < 1 - eps (value filter kept in f32).
    # Padded key columns carry label -1 while real anchors have labels >= 0, so `same`
    # already excludes them -> no col_valid needed on the positive side.
    pos_mask = same & not_self & (sim < (1.0 - EPSILON))
    # neg_pair_: different label (col_valid IS needed here: pad labels also differ).
    neg_mask = jnp.logical_not(same) & col_valid

    # Element-wise epilogue dtype: bf16 on v6e/v7x (2x VPU/EUP packing), f32 on v5e /
    # in debug mode.  min/max are exact in either dtype.
    s = sim.astype(ew_dtype)

    # Hard-pair mining thresholds (masked lane reductions).
    min_pos = jnp.min(jnp.where(pos_mask, s, jnp.inf), axis=-1, keepdims=True)
    max_neg = jnp.max(jnp.where(neg_mask, s, -jnp.inf), axis=-1, keepdims=True)

    neg_sel = neg_mask & ((s + MARGIN) > min_pos)
    # NB: the reference module selects positives with `pos_pair_ < max(neg_pair_)`
    # (no margin term) -- kept exactly as in the spec.
    pos_sel = pos_mask & (s < max_neg)

    t = s - THRESH
    pos_exp = jnp.where(pos_sel, jnp.exp(t * (-SCALE_POS)), 0.0)
    neg_exp = jnp.where(neg_sel, jnp.exp(t * SCALE_NEG), 0.0)

    # Sums accumulate in f32 regardless of the epilogue dtype.
    pos_sum = jnp.sum(pos_exp, axis=-1, keepdims=True, dtype=jnp.float32)   # (TB, 1)
    neg_sum = jnp.sum(neg_exp, axis=-1, keepdims=True, dtype=jnp.float32)   # (TB, 1)

    # Validity derived from the sums (exp > 0 wherever selected) -- no count reductions.
    valid = (pos_sum > 0.0) & (neg_sum > 0.0) & row_valid

    per_anchor = ((1.0 / SCALE_POS) * jnp.log(1.0 + pos_sum)
                  + (1.0 / SCALE_NEG) * jnp.log(1.0 + neg_sum))

    total = jnp.sum(jnp.where(valid, per_anchor, 0.0), keepdims=True)                 # (1,1)
    skipped = jnp.sum(jnp.where(row_valid & jnp.logical_not(valid), 1.0, 0.0),
                      keepdims=True)                                                  # (1,1)

    # One fused lane-dense per-tile partial block: loss in sublane 0, skips in sublane 1.
    sub = lax.broadcasted_iota(jnp.int32, (8, 128), 0)
    out_ref[0] = jnp.where(
        sub == 0, jnp.broadcast_to(total, (8, 128)),
        jnp.where(sub == 1, jnp.broadcast_to(skipped, (8, 128)), 0.0)
    ).astype(jnp.float32)


@functools.partial(
    jax.jit,
    static_argnames=("bp", "dp", "tb", "num_tiles", "matmul_dtype", "ew_dtype",
                     "vmem_limit", "use_buffered"))
def _ms_loss_impl(feats, labels, *, bp, dp, tb, num_tiles, matmul_dtype, ew_dtype,
                  vmem_limit, use_buffered):
    b, d = feats.shape
    feats = feats.astype(jnp.float32)
    labels = labels.reshape(b).astype(jnp.int32)

    # L2-normalize once, outside the kernel (rsqrt -> EUP).  The tiny floor avoids
    # 0/0 = NaN for an all-zero row (PyTorch Normalize would NaN there).
    sq = jnp.sum(feats * feats, axis=1, keepdims=True)
    xn = (feats * lax.rsqrt(jnp.maximum(sq, 1e-12))).astype(matmul_dtype)

    # Pad to lane/MXU-friendly shapes; padded rows carry the sentinel label -1.
    xn_p = jnp.zeros((bp, dp), matmul_dtype).at[:b, :d].set(xn)   # query-stream source
    xn_t = xn_p.T                                                 # (Dp, Bp) resident keys^T
    lab_p = jnp.full((bp,), -1, jnp.int32).at[:b].set(labels)
    lab_col = lab_p.reshape(bp, 1)
    lab_row = lab_p.reshape(1, bp)

    def _resident(shape):
        idx = lambda i: (0,) * len(shape)
        if use_buffered:
            return pl.BlockSpec(shape, idx, pipeline_mode=pl.Buffered(1))
        return pl.BlockSpec(shape, idx)

    kernel = functools.partial(_ms_loss_kernel, ew_dtype=ew_dtype)
    parts = pl.pallas_call(
        kernel,
        grid=(num_tiles,),
        in_specs=[
            _resident((dp, bp)),                        # normalized keys^T, resident
            _resident((bp, 1)),                         # all labels (column), resident
            _resident((1, bp)),                         # all labels (row), resident
            pl.BlockSpec((tb, dp), lambda i: (i, 0)),   # anchor/query tile, streamed
        ],
        out_specs=pl.BlockSpec((1, 8, 128), lambda i: (i, 0, 0)),
        out_shape=jax.ShapeDtypeStruct((num_tiles, 8, 128), jnp.float32),
        compiler_params=pltpu.CompilerParams(
            dimension_semantics=("parallel",),           # v7x: anchor tiles across both TCs
            vmem_limit_bytes=vmem_limit,
        ),
    )(xn_t, lab_col, lab_row, xn_p)

    loss = jnp.sum(parts[:, 0, 0]) / jnp.float32(b)
    ptr = jnp.sum(parts[:, 1, 0]).astype(jnp.int32)
    # TODO(synk): the original module returns a bare 0-d tensor (not a tuple) when every
    # anchor is skipped; here we always return (loss=0.0, ptr=B) in that case.
    return loss, ptr


def multi_similarity_loss(feats, labels, *, block_rows=None,
                          matmul_dtype=jnp.bfloat16, epilogue_dtype=None):
    """feats: (B, D) float, labels: (B,) non-negative int.  Returns (loss, ptr).

    matmul_dtype: bf16 is the production path (native MXU on v5e/v6e/v7x); float32 is a
    slow multi-pass debug mode only.  epilogue_dtype: dtype of the element-wise mask/exp
    epilogue; default is bf16 on chips with a bf16 VPU/EUP (v6e/v7x) and f32 on v5e.
    block_rows: anchor-tile size; default 512 on 128-MiB-VMEM parts (v5e/v6e), 256 on v7x.
    """
    b, d = feats.shape
    vmem_cap, bf16_ok = _tpu_defaults()
    if block_rows is None:
        block_rows = 512 if vmem_cap >= (100 << 20) else 256
    ew = epilogue_dtype if epilogue_dtype is not None else (
        jnp.bfloat16 if bf16_ok else jnp.float32)

    # Lane/MXU-friendly padded sizes; anchor-tile size sublane-aligned for the matmul
    # dtype, with at least 2 tiles so the parallel axis can use both v7x TensorCores.
    dp = _round_up(max(d, 128), 128)
    bp = _round_up(max(b, 128), 128)
    sub = {1: 32, 2: 16}.get(jnp.dtype(matmul_dtype).itemsize, 8)
    tb = min(int(block_rows), bp)
    if bp // tb < 2:
        tb = bp // 2
    tb = max(sub, _round_up(tb, sub))
    bp = _round_up(bp, tb)
    num_tiles = bp // tb

    use_buffered = _buffered_supported()

    # Scoped-VMEM budget: resident keys^T (single-buffered when supported) + streamed
    # query double-buffer + (TB, Bp) epilogue temporaries, clamped to ~85% of capacity.
    itemsize = jnp.dtype(matmul_dtype).itemsize
    key_bufs = 1 if use_buffered else 2
    vmem_needed = (key_bufs * bp * dp * itemsize       # resident normalized keys^T
                   + 2 * tb * dp * itemsize            # double-buffered query tile
                   + key_bufs * bp * 640               # lane-padded label row/column blocks
                   + 12 * tb * bp * 4                  # (TB, Bp) epilogue temporaries
                   + (4 << 20))                        # slack for compiler temporaries
    vmem_limit = int(min(max(vmem_needed, 32 << 20), int(0.85 * vmem_cap)))
    # TODO(synk): for very large B (keys no longer resident under the VMEM cap, e.g.
    # B >= ~4-8K on v7x's 64 MiB) add a second "arbitrary" key-tile grid axis with a
    # two-pass mining/accumulation scheme instead of the all-keys-resident layout here.

    return _ms_loss_impl(feats, labels, bp=bp, dp=dp, tb=tb, num_tiles=num_tiles,
                         matmul_dtype=matmul_dtype, ew_dtype=ew,
                         vmem_limit=vmem_limit, use_buffered=use_buffered)


def _reference(feats, labels, matmul_dtype, epilogue_dtype):
    """Pure-JAX reference mirroring the kernel numerics (and the PyTorch loop)."""
    feats = feats.astype(jnp.float32)
    b = feats.shape[0]
    sq = jnp.sum(feats * feats, axis=1, keepdims=True)
    xn = feats * lax.rsqrt(jnp.maximum(sq, 1e-12))
    xs = xn.astype(matmul_dtype).astype(jnp.float32)   # same input rounding as the kernel
    sim = jnp.dot(xs, xs.T, precision=lax.Precision.HIGHEST)
    s = sim.astype(epilogue_dtype)
    same = labels[:, None] == labels[None, :]
    not_self = ~jnp.eye(b, dtype=bool)
    pos_mask = same & not_self & (sim < 1.0 - EPSILON)
    neg_mask = ~same
    min_pos = jnp.min(jnp.where(pos_mask, s, jnp.inf), axis=-1, keepdims=True)
    max_neg = jnp.max(jnp.where(neg_mask, s, -jnp.inf), axis=-1, keepdims=True)
    neg_sel = neg_mask & ((s + MARGIN) > min_pos)
    pos_sel = pos_mask & (s < max_neg)
    t = s - THRESH
    pos_sum = jnp.sum(jnp.where(pos_sel, jnp.exp(t * (-SCALE_POS)), 0.0),
                      axis=-1, dtype=jnp.float32)
    neg_sum = jnp.sum(jnp.where(neg_sel, jnp.exp(t * SCALE_NEG), 0.0),
                      axis=-1, dtype=jnp.float32)
    valid = (pos_sum > 0.0) & (neg_sum > 0.0)
    per = ((1.0 / SCALE_POS) * jnp.log(1.0 + pos_sum)
           + (1.0 / SCALE_NEG) * jnp.log(1.0 + neg_sum))
    loss = jnp.sum(jnp.where(valid, per, 0.0)) / b
    ptr = jnp.sum(~valid).astype(jnp.int32)
    return loss, ptr


if __name__ == "__main__":
    key = jax.random.PRNGKey(0)
    k1, k2 = jax.random.split(key)

    # --- Test A: small batch, bf16 MXU path + bf16 epilogue, padding 12 -> 128,
    #     two singleton identities exercising the skip/ptr branch. ---
    b1, d1 = 12, 48
    feats1 = jax.random.normal(k1, (b1, d1), dtype=jnp.float32)
    labels1 = jnp.array([0, 0, 1, 1, 2, 2, 3, 3, 4, 4, 5, 6], dtype=jnp.int32)
    loss1, ptr1 = multi_similarity_loss(feats1, labels1,
                                        matmul_dtype=jnp.bfloat16,
                                        epilogue_dtype=jnp.bfloat16)
    jax.block_until_ready((loss1, ptr1))
    rl1, rp1 = _reference(feats1, labels1, jnp.bfloat16, jnp.bfloat16)
    assert jnp.allclose(loss1, rl1, rtol=3e-2, atol=1e-3), (loss1, rl1)
    assert int(ptr1) == int(rp1), (ptr1, rp1)

    # --- Test B: multi-tile grid (264 anchors -> >= 2 anchor tiles), float32 debug
    #     path (exact fidelity to the f32 PyTorch module). ---
    b2, d2 = 264, 96
    feats2 = jax.random.normal(k2, (b2, d2), dtype=jnp.float32)
    labels2 = jnp.concatenate([jnp.arange(260, dtype=jnp.int32) // 4,
                               jnp.array([900, 901, 902, 903], dtype=jnp.int32)])
    loss2, ptr2 = multi_similarity_loss(feats2, labels2,
                                        matmul_dtype=jnp.float32,
                                        epilogue_dtype=jnp.float32)
    jax.block_until_ready((loss2, ptr2))
    rl2, rp2 = _reference(feats2, labels2, jnp.float32, jnp.float32)
    assert jnp.allclose(loss2, rl2, rtol=2e-4, atol=1e-4), (loss2, rl2)
    assert int(ptr2) == int(rp2), (ptr2, rp2)

    # --- Test C: generation-aware defaults (block_rows / epilogue from get_tpu_info). ---
    loss3, ptr3 = multi_similarity_loss(feats1, labels1)
    jax.block_until_ready((loss3, ptr3))
    assert bool(jnp.isfinite(loss3)), loss3
    assert 0 <= int(ptr3) <= b1, ptr3

    print("KERNEL_OK")
</pallas_src>

<mosaic_0001>
module attributes {stable_mosaic.version = 11 : i64} {
  func.func @_ms_loss_kernel(%arg0: i32, %arg1: memref<128x128xbf16, #tpu.memory_space<vmem>>, %arg2: memref<128x1xi32, #tpu.memory_space<vmem>>, %arg3: memref<1x128xi32, #tpu.memory_space<vmem>>, %arg4: memref<64x128xbf16, #tpu.memory_space<vmem>>, %arg5: memref<1x8x128xf32, #tpu.memory_space<vmem>>) attributes {dimension_semantics = [#tpu.dimension_semantics<parallel>], iteration_bounds = array<i64: 2>, scalar_prefetch = 0 : i64, scratch_operands = 0 : i64, tpu.core_type = #tpu.core_type<tc>, window_params = [{pipeline_mode = #tpu.pipeline_mode<synchronous>, transform_indices = @transform_0, window_bounds = array<i64: 128, 128>}, {pipeline_mode = #tpu.pipeline_mode<synchronous>, transform_indices = @transform_1, window_bounds = array<i64: 128, 1>}, {pipeline_mode = #tpu.pipeline_mode<synchronous>, transform_indices = @transform_2, window_bounds = array<i64: 1, 128>}, {transform_indices = @transform_3, window_bounds = array<i64: 64, 128>}, {transform_indices = @transform_4, window_bounds = array<i64: 1, 8, 128>}]} {
    %c64_i32 = arith.constant 64 : i32
    %0 = arith.muli %arg0, %c64_i32 : i32
    %1 = tpu.assume_multiple %0, 64 : i32
    %c0 = arith.constant 0 : index
    %c0_0 = arith.constant 0 : index
    %2 = vector.load %arg4[%c0, %c0_0] : memref<64x128xbf16, #tpu.memory_space<vmem>>, vector<64x128xbf16>
    %c0_1 = arith.constant 0 : index
    %c0_2 = arith.constant 0 : index
    %3 = vector.load %arg1[%c0_1, %c0_2] : memref<128x128xbf16, #tpu.memory_space<vmem>>, vector<128x128xbf16>
    %cst = arith.constant dense<0.000000e+00> : vector<64x128xf32>
    %4 = tpu.matmul %2, %3, %cst {dimension_numbers = #tpu.dot_dimension_numbers<[1], [0], [0], [1], [0, 0, 1, 1], [], []>} : vector<64x128xbf16>, vector<128x128xbf16>, vector<64x128xf32> -> vector<64x128xf32>
    %5 = arith.index_cast %1 : i32 to index
    %c0_3 = arith.constant 0 : index
    %6 = vector.load %arg2[%5, %c0_3] : memref<128x1xi32, #tpu.memory_space<vmem>>, vector<64x1xi32>
    %c0_4 = arith.constant 0 : index
    %c0_5 = arith.constant 0 : index
    %7 = vector.load %arg3[%c0_4, %c0_5] : memref<1x128xi32, #tpu.memory_space<vmem>>, vector<1x128xi32>
    %8 = vector.broadcast %6 : vector<64x1xi32> to vector<64x128xi32>
    %9 = vector.broadcast %7 : vector<1x128xi32> to vector<64x128xi32>
    %10 = arith.cmpi eq, %8, %9 : vector<64x128xi32>
    %c0_i32 = arith.constant 0 : i32
    %11 = vector.broadcast %c0_i32 : i32 to vector<64x1xi32>
    %12 = arith.cmpi sge, %6, %11 : vector<64x1xi32>
    %c0_i32_6 = arith.constant 0 : i32
    %13 = vector.broadcast %c0_i32_6 : i32 to vector<1x128xi32>
    %14 = arith.cmpi sge, %7, %13 : vector<1x128xi32>
    %15 = tpu.iota {dimensions = array<i32: 0>} : vector<64x128xi32>
    %16 = vector.broadcast %1 : i32 to vector<64x128xi32>
    %17 = arith.addi %16, %15 : vector<64x128xi32>
    %18 = tpu.iota {dimensions = array<i32: 1>} : vector<64x128xi32>
    %19 = arith.cmpi ne, %17, %18 : vector<64x128xi32>
    %20 = arith.andi %10, %19 : vector<64x128xi1>
    %cst_7 = arith.constant 0.999989986 : f32
    %21 = vector.broadcast %cst_7 : f32 to vector<64x128xf32>
    %22 = arith.cmpf olt, %4, %21 : vector<64x128xf32>
    %23 = arith.andi %20, %22 : vector<64x128xi1>
    %cst_8 = arith.constant dense<true> : vector<64x128xi1>
    %24 = arith.xori %10, %cst_8 : vector<64x128xi1>
    %25 = vector.broadcast %14 : vector<1x128xi1> to vector<64x128xi1>
    %26 = arith.andi %24, %25 : vector<64x128xi1>
    %27 = arith.truncf %4 : vector<64x128xf32> to vector<64x128xbf16>
    %cst_9 = arith.constant 0x7F800000 : f32
    %28 = arith.truncf %cst_9 : f32 to bf16
    %29 = vector.broadcast %28 : bf16 to vector<64x128xbf16>
    %30 = arith.select %23, %27, %29 : vector<64x128xi1>, vector<64x128xbf16>
    %cst_10 = arith.constant dense<0x7F80> : vector<64xbf16>
    %31 = vector.multi_reduction <minimumf>, %30, %cst_10 [1] : vector<64x128xbf16> to vector<64xbf16>
    %32 = vector.shape_cast %31 : vector<64xbf16> to vector<64x1xbf16>
    %cst_11 = arith.constant 0xFF800000 : f32
    %33 = arith.truncf %cst_11 : f32 to bf16
    %34 = vector.broadcast %33 : bf16 to vector<64x128xbf16>
    %35 = arith.select %26, %27, %34 : vector<64x128xi1>, vector<64x128xbf16>
    %cst_12 = arith.constant dense<0xFF80> : vector<64xbf16>
    %36 = vector.multi_reduction <maximumf>, %35, %cst_12 [1] : vector<64x128xbf16> to vector<64xbf16>
    %37 = vector.shape_cast %36 : vector<64xbf16> to vector<64x1xbf16>
    %cst_13 = arith.constant 3.007810e-01 : bf16
    %38 = vector.broadcast %cst_13 : bf16 to vector<64x128xbf16>
    %39 = arith.addf %27, %38 : vector<64x128xbf16>
    %40 = vector.broadcast %32 : vector<64x1xbf16> to vector<64x128xbf16>
    %41 = arith.cmpf ogt, %39, %40 : vector<64x128xbf16>
    %42 = arith.andi %26, %41 : vector<64x128xi1>
    %43 = vector.broadcast %37 : vector<64x1xbf16> to vector<64x128xbf16>
    %44 = arith.cmpf olt, %27, %43 : vector<64x128xbf16>
    %45 = arith.andi %23, %44 : vector<64x128xi1>
    %cst_14 = arith.constant 5.000000e-01 : bf16
    %46 = vector.broadcast %cst_14 : bf16 to vector<64x128xbf16>
    %47 = arith.subf %27, %46 : vector<64x128xbf16>
    %cst_15 = arith.constant -2.001950e-01 : bf16
    %48 = vector.broadcast %cst_15 : bf16 to vector<64x128xbf16>
    %49 = arith.mulf %47, %48 : vector<64x128xbf16>
    %50 = math.exp %49 : vector<64x128xbf16>
    %cst_16 = arith.constant 0.000000e+00 : f32
    %51 = arith.truncf %cst_16 : f32 to bf16
    %52 = vector.broadcast %51 : bf16 to vector<64x128xbf16>
    %53 = arith.select %45, %50, %52 : vector<64x128xi1>, vector<64x128xbf16>
    %cst_17 = arith.constant 4.000000e+01 : bf16
    %54 = vector.broadcast %cst_17 : bf16 to vector<64x128xbf16>
    %55 = arith.mulf %47, %54 : vector<64x128xbf16>
    %56 = math.exp %55 : vector<64x128xbf16>
    %cst_18 = arith.constant 0.000000e+00 : f32
    %57 = arith.truncf %cst_18 : f32 to bf16
    %58 = vector.broadcast %57 : bf16 to vector<64x128xbf16>
    %59 = arith.select %42, %56, %58 : vector<64x128xi1>, vector<64x128xbf16>
    %60 = arith.extf %53 : vector<64x128xbf16> to vector<64x128xf32>
    %cst_19 = arith.constant dense<0.000000e+00> : vector<64xf32>
    %61 = vector.multi_reduction <add>, %60, %cst_19 [1] : vector<64x128xf32> to vector<64xf32>
    %62 = vector.shape_cast %61 : vector<64xf32> to vector<64x1xf32>
    %63 = arith.extf %59 : vector<64x128xbf16> to vector<64x128xf32>
    %cst_20 = arith.constant dense<0.000000e+00> : vector<64xf32>
    %64 = vector.multi_reduction <add>, %63, %cst_20 [1] : vector<64x128xf32> to vector<64xf32>
    %65 = vector.shape_cast %64 : vector<64xf32> to vector<64x1xf32>
    %cst_21 = arith.constant 0.000000e+00 : f32
    %66 = vector.broadcast %cst_21 : f32 to vector<64x1xf32>
    %67 = arith.cmpf ogt, %62, %66 : vector<64x1xf32>
    %cst_22 = arith.constant 0.000000e+00 : f32
    %68 = vector.broadcast %cst_22 : f32 to vector<64x1xf32>
    %69 = arith.cmpf ogt, %65, %68 : vector<64x1xf32>
    %70 = arith.andi %67, %69 : vector<64x1xi1>
    %71 = arith.andi %70, %12 : vector<64x1xi1>
    %cst_23 = arith.constant 1.000000e+00 : f32
    %72 = vector.broadcast %cst_23 : f32 to vector<64x1xf32>
    %73 = arith.addf %72, %62 : vector<64x1xf32>
    %74 = math.log %73 : vector<64x1xf32>
    %cst_24 = arith.constant 5.000000e+00 : f32
    %75 = vector.broadcast %cst_24 : f32 to vector<64x1xf32>
    %76 = arith.mulf %75, %74 : vector<64x1xf32>
    %cst_25 = arith.constant 1.000000e+00 : f32
    %77 = vector.broadcast %cst_25 : f32 to vector<64x1xf32>
    %78 = arith.addf %77, %65 : vector<64x1xf32>
    %79 = math.log %78 : vector<64x1xf32>
    %cst_26 = arith.constant 2.500000e-02 : f32
    %80 = vector.broadcast %cst_26 : f32 to vector<64x1xf32>
    %81 = arith.mulf %80, %79 : vector<64x1xf32>
    %82 = arith.addf %76, %81 : vector<64x1xf32>
    %cst_27 = arith.constant 0.000000e+00 : f32
    %83 = vector.broadcast %cst_27 : f32 to vector<64x1xf32>
    %84 = arith.select %71, %82, %83 : vector<64x1xi1>, vector<64x1xf32>
    %85 = vector.shape_cast %84 : vector<64x1xf32> to vector<1x64x1xf32>
    %cst_28 = arith.constant dense<0.000000e+00> : vector<1xf32>
    %86 = vector.multi_reduction <add>, %85, %cst_28 [1, 2] : vector<1x64x1xf32> to vector<1xf32>
    %87 = vector.shape_cast %86 : vector<1xf32> to vector<1x1x1xf32>
    %88 = vector.extract %87[0, 0, 0] : f32 from vector<1x1x1xf32>
    %89 = vector.broadcast %88 : f32 to vector<1x1xf32>
    %cst_29 = arith.constant dense<true> : vector<64x1xi1>
    %90 = arith.xori %71, %cst_29 : vector<64x1xi1>
    %91 = arith.andi %12, %90 : vector<64x1xi1>
    %cst_30 = arith.constant 1.000000e+00 : f32
    %cst_31 = arith.constant 0.000000e+00 : f32
    %92 = vector.broadcast %cst_30 : f32 to vector<64x1xf32>
    %93 = vector.broadcast %cst_31 : f32 to vector<64x1xf32>
    %94 = arith.select %91, %92, %93 : vector<64x1xi1>, vector<64x1xf32>
    %95 = vector.shape_cast %94 : vector<64x1xf32> to vector<1x64x1xf32>
    %cst_32 = arith.constant dense<0.000000e+00> : vector<1xf32>
    %96 = vector.multi_reduction <add>, %95, %cst_32 [1, 2] : vector<1x64x1xf32> to vector<1xf32>
    %97 = vector.shape_cast %96 : vector<1xf32> to vector<1x1x1xf32>
    %98 = vector.extract %97[0, 0, 0] : f32 from vector<1x1x1xf32>
    %99 = vector.broadcast %98 : f32 to vector<1x1xf32>
    %100 = tpu.iota {dimensions = array<i32: 0>} : vector<8x128xi32>
    %c0_i32_33 = arith.constant 0 : i32
    %101 = vector.broadcast %c0_i32_33 : i32 to vector<8x128xi32>
    %102 = arith.cmpi eq, %100, %101 : vector<8x128xi32>
    %103 = vector.shape_cast %89 : vector<1x1xf32> to vector<1x1xf32>
    %104 = vector.broadcast %103 : vector<1x1xf32> to vector<8x128xf32>
    %c1_i32 = arith.constant 1 : i32
    %105 = vector.broadcast %c1_i32 : i32 to vector<8x128xi32>
    %106 = arith.cmpi eq, %100, %105 : vector<8x128xi32>
    %107 = vector.shape_cast %99 : vector<1x1xf32> to vector<1x1xf32>
    %108 = vector.broadcast %107 : vector<1x1xf32> to vector<8x128xf32>
    %cst_34 = arith.constant 0.000000e+00 : f32
    %109 = vector.broadcast %cst_34 : f32 to vector<8x128xf32>
    %110 = arith.select %106, %108, %109 : vector<8x128xi1>, vector<8x128xf32>
    %111 = arith.select %102, %104, %110 : vector<8x128xi1>, vector<8x128xf32>
    %c0_35 = arith.constant 0 : index
    %c0_36 = arith.constant 0 : index
    %c0_37 = arith.constant 0 : index
    %112 = vector.load %arg5[%c0_35, %c0_36, %c0_37] : memref<1x8x128xf32, #tpu.memory_space<vmem>>, vector<1x8x128xf32>
    %113 = vector.shape_cast %112 : vector<1x8x128xf32> to vector<8x128xf32>
    %114 = vector.shape_cast %111 : vector<8x128xf32> to vector<1x8x128xf32>
    tpu.vector_store %arg5[%c0_35, %c0_36, %c0_37], %114 {strides = array<i32>} : memref<1x8x128xf32, #tpu.memory_space<vmem>>, vector<1x8x128xf32>,
    return
  }
  func.func @transform_0(%arg0: i32) -> (i32, i32) {
    %c0_i32 = arith.constant 0 : i32
    %c0_i32_0 = arith.constant 0 : i32
    %c0_i32_1 = arith.constant 0 : i32
    return %c0_i32, %c0_i32_0 : i32, i32
  }
  func.func @transform_1(%arg0: i32) -> (i32, i32) {
    %c0_i32 = arith.constant 0 : i32
    %c0_i32_0 = arith.constant 0 : i32
    %c0_i32_1 = arith.constant 0 : i32
    return %c0_i32, %c0_i32_0 : i32, i32
  }
  func.func @transform_2(%arg0: i32) -> (i32, i32) {
    %c0_i32 = arith.constant 0 : i32
    %c0_i32_0 = arith.constant 0 : i32
    %c0_i32_1 = arith.constant 0 : i32
    return %c0_i32, %c0_i32_0 : i32, i32
  }
  func.func @transform_3(%arg0: i32) -> (i32, i32) {
    %c0_i32 = arith.constant 0 : i32
    %c0_i32_0 = arith.constant 0 : i32
    return %arg0, %c0_i32 : i32, i32
  }
  func.func @transform_4(%arg0: i32) -> (i32, i32, i32) {
    %c0_i32 = arith.constant 0 : i32
    %c0_i32_0 = arith.constant 0 : i32
    %c0_i32_1 = arith.constant 0 : i32
    return %arg0, %c0_i32, %c0_i32_0 : i32, i32, i32
  }
}

</mosaic_0001>

<llo_original>
// kernel: _ms_loss_impl.1
$region0: #{_ms_loss_impl.1}
  #allocation0 [shape = 'u32[]', space=smem, size = 0x4, offset = 0x4, fixed_abs, tag = 'smem constant byte address 0x4 - core index']
  #allocation1 [shape = 'u32[144,128]{1,0:T(1,128)}', space=vmem, size = 0x12000, scoped, tag = 'internal scratch']
  %s0 = inlined_call_operand.vmem [shape: bf16[128,128], index: 0, kind: input, shape index: {}]
  %s1 = inlined_call_operand.vmem [shape: s32[128,1], index: 1, kind: input, shape index: {}]
  %s2 = inlined_call_operand.vmem [shape: s32[1,128], index: 2, kind: input, shape index: {}]
  %s3 = inlined_call_operand.vmem [shape: bf16[128,128], index: 3, kind: input, shape index: {}]
  %s4 = inlined_call_operand.vmem [shape: f32[2,8,128], index: 4, kind: output, shape index: {}]
  %s5 = sld [smem:[#allocation0]]
  $region49: #{_ms_loss_impl.1} parent=0
    _
  %s7 = ssub.s32 1, %s5
  %s8 = scalar_select 0, %s7, %s5
  loop: start=0, step=1, limit=4
  $region2: #{_ms_loss_impl.1} parent=0 // loop_pre_header
    _
  $region3: #{_ms_loss_impl.1} parent=0 // loop_header
    %s10 = sphi 0, %s14
    %p11 = scmp.ge.s32.totalorder %s10, 4
    %s18 = sphi 0, %s18
    %s20 = sphi 0, %s18
    %s21 = sphi 0, %s20
    %s35 = sphi 0, %s21
    %s39 = sphi 0, %s39
    %s41 = sphi 0, %s39
    %s42 = sphi 0, %s41
    %s56 = sphi 0, %s42
    %s60 = sphi 0, %s60
    %s62 = sphi 0, %s60
    %s63 = sphi 0, %s62
    %s77 = sphi 0, %s63
    %s83 = sphi 0, %s85
    %s86 = sphi 0, %s83
    %s87 = sphi 0, %s86
    %s103 = sphi 0, %s87
    %s109 = sphi 0, %s111
    %s112 = sphi 0, %s109
    %s113 = sphi 0, %s112
    %s129 = sphi 0, %s113
  $region4: #{_ms_loss_impl.1} parent=0 // loop_header_branch
    %13 = sbr.rel (%p11) target = $region8
  $region5: #{_ms_loss_impl.1} parent=0 // loop_body
    %s15 = ssub.s32 %s10, 1
    %s16 = ssub.s32 %s10, 2
    %s17 = sadd.s32 %s10, 1
    %s19 = sadd.s32 %s18, 1
    %p22 = scmp.eq.s32.totalorder %s10, 1
    %p23 = scmp.ne.s32.totalorder %s18, %s20
    %p24 = scmp.eq.s32.totalorder %s10, 0
    %p25 = por %p23, %p24
    %p26 = scmp.ne.s32.totalorder %s18, %s20
    %p27 = scmp.eq.s32.totalorder %s15, 1
    %p28 = por %p26, %p27
    %p29 = scmp.ne.s32.totalorder %s20, %s21
    %p30 = scmp.eq.s32.totalorder %s15, 0
    %p31 = por %p29, %p30
    %p32 = scmp.ne.s32.totalorder %s20, %s21
    %p33 = scmp.eq.s32.totalorder %s16, 1
    %p34 = por %p32, %p33
    %p36 = scmp.ne.s32.totalorder %s21, %s35
    %p37 = scmp.eq.s32.totalorder %s16, 0
    %p38 = por %p36, %p37
    %s40 = sadd.s32 %s39, 1
    %p43 = scmp.eq.s32.totalorder %s10, 1
    %p44 = scmp.ne.s32.totalorder %s39, %s41
    %p45 = scmp.eq.s32.totalorder %s10, 0
    %p46 = por %p44, %p45
    %p47 = scmp.ne.s32.totalorder %s39, %s41
    %p48 = scmp.eq.s32.totalorder %s15, 1
    %p49 = por %p47, %p48
    %p50 = scmp.ne.s32.totalorder %s41, %s42
    %p51 = scmp.eq.s32.totalorder %s15, 0
    %p52 = por %p50, %p51
    %p53 = scmp.ne.s32.totalorder %s41, %s42
    %p54 = scmp.eq.s32.totalorder %s16, 1
    %p55 = por %p53, %p54
    %p57 = scmp.ne.s32.totalorder %s42, %s56
    %p58 = scmp.eq.s32.totalorder %s16, 0
    %p59 = por %p57, %p58
    %s61 = sadd.s32 %s60, 1
    %p64 = scmp.eq.s32.totalorder %s10, 1
    %p65 = scmp.ne.s32.totalorder %s60, %s62
    %p66 = scmp.eq.s32.totalorder %s10, 0
    %p67 = por %p65, %p66
    %p68 = scmp.ne.s32.totalorder %s60, %s62
    %p69 = scmp.eq.s32.totalorder %s15, 1
    %p70 = por %p68, %p69
    %p71 = scmp.ne.s32.totalorder %s62, %s63
    %p72 = scmp.eq.s32.totalorder %s15, 0
    %p73 = por %p71, %p72
    %p74 = scmp.ne.s32.totalorder %s62, %s63
    %p75 = scmp.eq.s32.totalorder %s16, 1
    %p76 = por %p74, %p75
    %p78 = scmp.ne.s32.totalorder %s63, %s77
    %p79 = scmp.eq.s32.totalorder %s16, 0
    %p80 = por %p78, %p79
    %s81 = ssub.s32 %s10, %s17
    %p82 = scmp.eq.s32.totalorder %s81, 0
    %s84 = sadd.s32 %s83, 1
    %s85 = scalar_select %p82, %s83, %s84
    %p88 = pneg %p82
    %p89 = scmp.eq.s32.totalorder %s10, 1
    %p90 = por %p88, %p89
    %p91 = scmp.ne.s32.totalorder %s83, %s86
    %p92 = scmp.eq.s32.totalorder %s10, 0
    %p93 = por %p91, %p92
    %p94 = scmp.ne.s32.totalorder %s83, %s86
    %p95 = scmp.eq.s32.totalorder %s15, 1
    %p96 = por %p94, %p95
    %p97 = scmp.ne.s32.totalorder %s86, %s87
    %p98 = scmp.eq.s32.totalorder %s15, 0
    %p99 = por %p97, %p98
    %p100 = scmp.ne.s32.totalorder %s86, %s87
    %p101 = scmp.eq.s32.totalorder %s16, 1
    %p102 = por %p100, %p101
    %p104 = scmp.ne.s32.totalorder %s87, %s103
    %p105 = scmp.eq.s32.totalorder %s16, 0
    %p106 = por %p104, %p105
    %s107 = ssub.s32 %s10, %s17
    %p108 = scmp.eq.s32.totalorder %s107, 0
    %s110 = sadd.s32 %s109, 1
    %s111 = scalar_select %p108, %s109, %s110
    %p114 = pneg %p108
    %p115 = scmp.eq.s32.totalorder %s10, 1
    %p116 = por %p114, %p115
    %p117 = scmp.ne.s32.totalorder %s109, %s112
    %p118 = scmp.eq.s32.totalorder %s10, 0
    %p119 = por %p117, %p118
    %p120 = scmp.ne.s32.totalorder %s109, %s112
    %p121 = scmp.eq.s32.totalorder %s15, 1
    %p122 = por %p120, %p121
    %p123 = scmp.ne.s32.totalorder %s112, %s113
    %p124 = scmp.eq.s32.totalorder %s15, 0
    %p125 = por %p123, %p124
    %p126 = scmp.ne.s32.totalorder %s112, %s113
    %p127 = scmp.eq.s32.totalorder %s16, 1
    %p128 = por %p126, %p127
    %p130 = scmp.ne.s32.totalorder %s113, %s129
    %p131 = scmp.eq.s32.totalorder %s16, 0
    %p132 = por %p130, %p131
    %p133 = scmp.le.s32.totalorder 1, %s10
    %p134 = scmp.lt.s32.totalorder %s10, 3
    %p135 = pnand %p133, %p134
    %p136 = pneg %p135
    // Predicated region
    $region9: #{_ms_loss_impl.1} parent=5 // pred_check
      _
    $region10: #{_ms_loss_impl.1} parent=5 // pred_check_branch
      %138 = sbr.rel (%p135) target = $region12
    $region11: #{_ms_loss_impl.1} parent=5 // pred_region
      %s139 = ssub.s32 %s10, 1
      // Predicated region
      $region13: #{_ms_loss_impl.1} parent=11 // pred_check
        %p140 = pneg %p31
      $region14: #{_ms_loss_impl.1} parent=11 // pred_check_branch
        %142 = sbr.rel (%p140) target = $region16
      $region15: #{_ms_loss_impl.1} parent=11 // pred_region
        _
      $region16: #{_ms_loss_impl.1} parent=11 // pred_fallthru
        _
      // Predicated region
      $region17: #{_ms_loss_impl.1} parent=11 // pred_check
        %p143 = pneg %p52
      $region18: #{_ms_loss_impl.1} parent=11 // pred_check_branch
        %145 = sbr.rel (%p143) target = $region20
      $region19: #{_ms_loss_impl.1} parent=11 // pred_region
        _
      $region20: #{_ms_loss_impl.1} parent=11 // pred_fallthru
        _
      // Predicated region
      $region21: #{_ms_loss_impl.1} parent=11 // pred_check
        %p146 = pneg %p73
      $region22: #{_ms_loss_impl.1} parent=11 // pred_check_branch
        %148 = sbr.rel (%p146) target = $region24
      $region23: #{_ms_loss_impl.1} parent=11 // pred_region
        _
      $region24: #{_ms_loss_impl.1} parent=11 // pred_fallthru
        _
    $region12: #{_ms_loss_impl.1} parent=5 // pred_fallthru
      _
    %p149 = scmp.lt.s32.totalorder %s10, 2
    // Predicated region
    $region25: #{_ms_loss_impl.1} parent=5 // pred_check
      %p150 = pneg %p149
    $region26: #{_ms_loss_impl.1} parent=5 // pred_check_branch
      %152 = sbr.rel (%p150) target = $region28
    $region27: #{_ms_loss_impl.1} parent=5 // pred_region
      // Predicated region
      $region29: #{_ms_loss_impl.1} parent=27 // pred_check
        %p153 = pneg %p93
      $region30: #{_ms_loss_impl.1} parent=27 // pred_check_branch
        %155 = sbr.rel (%p153) target = $region32
      $region31: #{_ms_loss_impl.1} parent=27 // pred_region
        %s156 = smul.u32 8, %s10
        %p157 = scmp.lt.s32.totalorder %s156, 15
        %s158 = scalar_select %p157, %s156, 15
        %s159 = smul.addr %s158, 4
        %s160 = scalar_lea.vmem %s3, %s159
        %s161 = smul.u32 8, %s10
      $region32: #{_ms_loss_impl.1} parent=27 // pred_fallthru
        _
    $region28: #{_ms_loss_impl.1} parent=5 // pred_fallthru
      _
    %p162 = scmp.le.s32.totalorder 1, %s10
    %p163 = scmp.lt.s32.totalorder %s10, 3
    %p164 = pnand %p162, %p163
    %p165 = pneg %p164
    // Predicated region
    $region33: #{_ms_loss_impl.1} parent=5 // pred_check
      _
    $region34: #{_ms_loss_impl.1} parent=5 // pred_check_branch
      %167 = sbr.rel (%p164) target = $region36
    $region35: #{_ms_loss_impl.1} parent=5 // pred_region
      %s168 = ssub.s32 %s10, 1
      %p169 = pneg %p31
      %p170 = pneg %p28
      %p171 = pneg %p52
      %p172 = pneg %p49
      %p173 = pneg %p73
      %p174 = pneg %p70
      %s175 = smul.u32 8, %s15
      %p176 = scmp.lt.s32.totalorder %s175, 15
      %s177 = scalar_select %p176, %s175, 15
      %s178 = smul.addr %s177, 4
      %s179 = scalar_lea.vmem %s3, %s178
      %p180 = pneg %p99
      %p181 = pneg %p96
      %p182 = pneg %p125
      %p183 = pneg %p122
      %p184 = scmp.lt.s32.totalorder %s15, 1
      %s185 = scalar_select %p184, %s15, 1
      %s186 = smul.addr %s185, 8
      %s187 = scalar_lea.vmem %s4, %s186
      %s188 = smul.u32 8, %s15
      %p189 = scmp.lt.s32.totalorder %s188, 15
      %s190 = scalar_select %p189, %s188, 15
      %s191 = smul.addr %s190, 4
      %s192 = scalar_lea.vmem %s3, %s191
      %s193 = smul.u32 8, %s15
      %p194 = scmp.lt.s32.totalorder %s15, 1
      %s195 = scalar_select %p194, %s15, 1
      %s196 = smul.addr %s195, 8
      %s197 = scalar_lea.vmem %s4, %s196
      %s207 = smul.u32 %s15, 64
      %v208 = vld [vmem:[%s192] sm:$0xf]
      %v209 = vld [vmem:[%s192 + $0x4] sm:$0xf]
      %v210 = vld [vmem:[%s192 + $0x8] sm:$0xf]
      %v211 = vld [vmem:[%s192 + $0xc] sm:$0xf]
      %v212 = vld [vmem:[%s192 + $0x10] sm:$0xf]
      %v213 = vld [vmem:[%s192 + $0x14] sm:$0xf]
      %v214 = vld [vmem:[%s192 + $0x18] sm:$0xf]
      %v215 = vld [vmem:[%s192 + $0x1c] sm:$0xf]
      %v216 = vld [vmem:[%s0] sm:$0xf]
      %v217 = vld [vmem:[%s0 + $0x4] sm:$0xf]
      %v218 = vld [vmem:[%s0 + $0x8] sm:$0xf]
      %v219 = vld [vmem:[%s0 + $0xc] sm:$0xf]
      %v220 = vld [vmem:[%s0 + $0x10] sm:$0xf]
      %v221 = vld [vmem:[%s0 + $0x14] sm:$0xf]
      %v222 = vld [vmem:[%s0 + $0x18] sm:$0xf]
      %v223 = vld [vmem:[%s0 + $0x1c] sm:$0xf]
      %v224 = vld [vmem:[%s0 + $0x20] sm:$0xf]
      %v225 = vld [vmem:[%s0 + $0x24] sm:$0xf]
      %v226 = vld [vmem:[%s0 + $0x28] sm:$0xf]
      %v227 = vld [vmem:[%s0 + $0x2c] sm:$0xf]
      %v228 = vld [vmem:[%s0 + $0x30] sm:$0xf]
      %v229 = vld [vmem:[%s0 + $0x34] sm:$0xf]
      %v230 = vld [vmem:[%s0 + $0x38] sm:$0xf]
      %v231 = vld [vmem:[%s0 + $0x3c] sm:$0xf]
      %v240 = vunpack.c.l.b16 %v208
      %v241 = vunpack.c.l.b16 %v209
      %v242 = vunpack.c.l.b16 %v210
      %v243 = vunpack.c.l.b16 %v211
      %v244 = vunpack.c.l.b16 %v212
      %v245 = vunpack.c.l.b16 %v213
      %v246 = vunpack.c.l.b16 %v214
      %v247 = vunpack.c.l.b16 %v215
      %v248 = vpack.c.b16 %v241, %v240
      %v249 = vpack.c.b16 %v243, %v242
      %v250 = vpack.c.b16 %v245, %v244
      %v251 = vpack.c.b16 %v247, %v246
      %v272 = vunpack.c.l.b16 %v216
      %v273 = vunpack.c.l.b16 %v217
      %v274 = vunpack.c.l.b16 %v218
      %v275 = vunpack.c.l.b16 %v219
      %v276 = vunpack.c.l.b16 %v220
      %v277 = vunpack.c.l.b16 %v221
      %v278 = vunpack.c.l.b16 %v222
      %v279 = vunpack.c.l.b16 %v223
      %v280 = vunpack.c.l.b16 %v224
      %v281 = vunpack.c.l.b16 %v225
      %v282 = vunpack.c.l.b16 %v226
      %v283 = vunpack.c.l.b16 %v227
      %v284 = vunpack.c.l.b16 %v228
      %v285 = vunpack.c.l.b16 %v229
      %v286 = vunpack.c.l.b16 %v230
      %v287 = vunpack.c.l.b16 %v231
      %v288 = vpack.c.b16 %v273, %v272
      %v289 = vpack.c.b16 %v275, %v274
      %v290 = vpack.c.b16 %v277, %v276
      %v291 = vpack.c.b16 %v279, %v278
      %v292 = vpack.c.b16 %v281, %v280
      %v293 = vpack.c.b16 %v283, %v282
      %v294 = vpack.c.b16 %v285, %v284
      %v295 = vpack.c.b16 %v287, %v286
      %304 = vmatprep.subr.bf16.mxu0 0
      %305 = vmatpush1.bf16.msra.mxu0 %v288
      %306 = vmatprep.subr.bf16.mxu0 0
      %307 = vmatpush1.bf16.msra.mxu0 %v289
      %308 = vmatprep.subr.bf16.mxu0 0
      %309 = vmatpush1.bf16.msra.mxu0 %v290
      %310 = vmatprep.subr.bf16.mxu0 0
      %311 = vmatpush1.bf16.msra.mxu0 %v291
      %312 = vmatprep.subr.bf16.mxu0 0
      %313 = vmatpush1.bf16.msra.mxu0 %v292
      %314 = vmatprep.subr.bf16.mxu0 0
      %315 = vmatpush1.bf16.msra.mxu0 %v293
      %316 = vmatprep.subr.bf16.mxu0 0
      %317 = vmatpush1.bf16.msra.mxu0 %v294
      %318 = vmatprep.subr.bf16.mxu0 0
      %319 = vmatpush1.bf16.msra.mxu0 %v295
      %320 = vmatprep.subr.bf16.mxu0 0
      %321 = vmatpush1.bf16.msra.mxu0 0
      %322 = vmatprep.subr.bf16.mxu0 0
      %323 = vmatpush1.bf16.msra.mxu0 0
      %324 = vmatprep.subr.bf16.mxu0 0
      %325 = vmatpush1.bf16.msra.mxu0 0
      %326 = vmatprep.subr.bf16.mxu0 0
      %327 = vmatpush1.bf16.msra.mxu0 0
      %328 = vmatprep.subr.bf16.mxu0 0
      %329 = vmatpush1.bf16.msra.mxu0 0
      %330 = vmatprep.subr.bf16.mxu0 0
      %331 = vmatpush1.bf16.msra.mxu0 0
      %332 = vmatprep.subr.bf16.mxu0 0
      %333 = vmatpush1.bf16.msra.mxu0 0
      %334 = vmatprep.subr.bf16.mxu0 0
      %335 = vmatpush1.bf16.msra.mxu0 0
      %336 = vmatprep.mubr.bf16.mxu0 0
      %337 = vmatmul.mubr.bf16.gmra.mrb[0].mxu0 %v248
      %v338 = vpop.f32.mrb[0].mxu0
      %v339 = vadd.f32 0.0, %v338
      %v340 = vpop.f32.mrb[0].mxu0
      %v341 = vpop.f32.mrb[0].mxu0
      %v342 = vadd.f32 0.0, %v341
      %v343 = vpop.f32.mrb[0].mxu0
      %344 = vmatprep.mubr.bf16.mxu0 0
      %345 = vmatmul.mubr.bf16.gmra.mrb[0].mxu0 %v249
      %v346 = vpop.f32.mrb[0].mxu0
      %v347 = vadd.f32 0.0, %v346
      %v348 = vpop.f32.mrb[0].mxu0
      %v349 = vpop.f32.mrb[0].mxu0
      %v350 = vadd.f32 0.0, %v349
      %v351 = vpop.f32.mrb[0].mxu0
      %352 = vmatprep.mubr.bf16.mxu0 0
      %353 = vmatmul.mubr.bf16.gmra.mrb[0].mxu0 %v250
      %v354 = vpop.f32.mrb[0].mxu0
      %v355 = vadd.f32 0.0, %v354
      %v356 = vpop.f32.mrb[0].mxu0
      %v357 = vpop.f32.mrb[0].mxu0
      %v358 = vadd.f32 0.0, %v357
      %v359 = vpop.f32.mrb[0].mxu0
      %360 = vmatprep.mubr.bf16.mxu0 0
      %361 = vmatmul.mubr.bf16.gmra.mrb[0].mxu0 %v251
      %v362 = vpop.f32.mrb[0].mxu0
      %v363 = vadd.f32 0.0, %v362
      %v364 = vpop.f32.mrb[0].mxu0
      %v365 = vpop.f32.mrb[0].mxu0
      %v366 = vadd.f32 0.0, %v365
      %v367 = vpop.f32.mrb[0].mxu0
      %368 = vdwg.mxu0
      %s369 = scalar_lea.vmem %s1, %s207
      %v370 = vld [vmem:[%s369] sm:$0xff]
      %v371 = vld [vmem:[%s369 + $0x8] sm:$0xff]
      %v372 = vld [vmem:[%s369 + $0x10] sm:$0xff]
      %v373 = vld [vmem:[%s369 + $0x18] sm:$0xff]
      %v374 = vld [vmem:[%s369 + $0x20] sm:$0xff]
      %v375 = vld [vmem:[%s369 + $0x28] sm:$0xff]
      %v376 = vld [vmem:[%s369 + $0x30] sm:$0xff]
      %v377 = vld [vmem:[%s369 + $0x38] sm:$0xff]
      %v378 = vld [vmem:[%s2] sm:$0x1]
      %379 = vset.pattern.permute.xlu0 0
      %380 = vperm.xlu0 %379, %v370
      %v381 = vpop.permute.xlu0 %380
      %382 = vset.pattern.permute.xlu0 0
      %383 = vperm.xlu0 %382, %v371
      %v384 = vpop.permute.xlu0 %383
      %385 = vset.pattern.permute.xlu0 0
      %386 = vperm.xlu0 %385, %v372
      %v387 = vpop.permute.xlu0 %386
      %388 = vset.pattern.permute.xlu0 0
      %389 = vperm.xlu0 %388, %v373
      %v390 = vpop.permute.xlu0 %389
      %391 = vset.pattern.permute.xlu0 0
      %392 = vperm.xlu0 %391, %v374
      %v393 = vpop.permute.xlu0 %392
      %394 = vset.pattern.permute.xlu0 0
      %395 = vperm.xlu0 %394, %v375
      %v396 = vpop.permute.xlu0 %395
      %397 = vset.pattern.permute.xlu0 0
      %398 = vperm.xlu0 %397, %v376
      %v399 = vpop.permute.xlu0 %398
      %400 = vset.pattern.permute.xlu0 0
      %401 = vperm.xlu0 %400, %v377
      %v402 = vpop.permute.xlu0 %401
      %v403 = vlaneseq
      %v404 = vshrl.u32 %v403, 7
      %v405 = vsub.s32 0, %v404
      %v406 = vrot.slane %v378, %v405
      %vm407 = vcmp.eq.s32.totalorder %v381, %v406
      %vm408 = vcmp.eq.s32.totalorder %v384, %v406
      %vm409 = vcmp.eq.s32.totalorder %v387, %v406
      %vm410 = vcmp.eq.s32.totalorder %v390, %v406
      %vm411 = vcmp.eq.s32.totalorder %v393, %v406
      %vm412 = vcmp.eq.s32.totalorder %v396, %v406
      %vm413 = vcmp.eq.s32.totalorder %v399, %v406
      %vm414 = vcmp.eq.s32.totalorder %v402, %v406
      %vm415 = vcmp.ge.s32.totalorder %v370, 0
      %vm416 = vcmp.ge.s32.totalorder %v371, 0
      %vm417 = vcmp.ge.s32.totalorder %v372, 0
      %vm418 = vcmp.ge.s32.totalorder %v373, 0
      %vm419 = vcmp.ge.s32.totalorder %v374, 0
      %vm420 = vcmp.ge.s32.totalorder %v375, 0
      %vm421 = vcmp.ge.s32.totalorder %v376, 0
      %vm422 = vcmp.ge.s32.totalorder %v377, 0
      %vm423 = vcmp.ge.s32.totalorder %v378, 0
      %v424 = vlaneseq
      %v425 = vshrl.u32 %v424, 7
      %v426 = vadd.s32 %v425, 8
      %v427 = vadd.s32 %v425, 16
      %v428 = vadd.s32 %v425, 24
      %v429 = vadd.s32 %v425, 32
      %v430 = vadd.s32 %v425, 40
      %v431 = vadd.s32 %v425, 48
      %v432 = vadd.s32 %v425, 56
      %v433 = vstv %s207
      %v434 = vadd.s32 %v433, %v425
      %v435 = vadd.s32 %v433, %v426
      %v436 = vadd.s32 %v433, %v427
      %v437 = vadd.s32 %v433, %v428
      %v438 = vadd.s32 %v433, %v429
      %v439 = vadd.s32 %v433, %v430
      %v440 = vadd.s32 %v433, %v431
      %v441 = vadd.s32 %v433, %v432
      %v442 = vlaneseq
      %v443 = vand.u32 %v442, 127
      %vm444 = vcmp.ne.s32.totalorder %v434, %v443
      %vm445 = vcmp.ne.s32.totalorder %v435, %v443
      %vm446 = vcmp.ne.s32.totalorder %v436, %v443
      %vm447 = vcmp.ne.s32.totalorder %v437, %v443
      %vm448 = vcmp.ne.s32.totalorder %v438, %v443
      %vm449 = vcmp.ne.s32.totalorder %v439, %v443
      %vm450 = vcmp.ne.s32.totalorder %v440, %v443
      %vm451 = vcmp.ne.s32.totalorder %v441, %v443
      %vm452 = vmand %vm407, %vm444
      %vm453 = vmand %vm408, %vm445
      %vm454 = vmand %vm409, %vm446
      %vm455 = vmand %vm410, %vm447
      %vm456 = vmand %vm411, %vm448
      %vm457 = vmand %vm412, %vm449
      %vm458 = vmand %vm413, %vm450
      %vm459 = vmand %vm414, %vm451
      %vm460 = vcmp.lt.f32.partialorder %v339, 0.99999
      %vm461 = vcmp.lt.f32.partialorder %v342, 0.99999
      %vm462 = vcmp.lt.f32.partialorder %v347, 0.99999
      %vm463 = vcmp.lt.f32.partialorder %v350, 0.99999
      %vm464 = vcmp.lt.f32.partialorder %v355, 0.99999
      %vm465 = vcmp.lt.f32.partialorder %v358, 0.99999
      %vm466 = vcmp.lt.f32.partialorder %v363, 0.99999
      %vm467 = vcmp.lt.f32.partialorder %v366, 0.99999
      %vm468 = vmand %vm452, %vm460
      %vm469 = vmand %vm453, %vm461
      %vm470 = vmand %vm454, %vm462
      %vm471 = vmand %vm455, %vm463
      %vm472 = vmand %vm456, %vm464
      %vm473 = vmand %vm457, %vm465
      %vm474 = vmand %vm458, %vm466
      %vm475 = vmand %vm459, %vm467
      %vm476 = vmxor %vm407, 1
      %vm477 = vmxor %vm408, 1
      %vm478 = vmxor %vm409, 1
      %vm479 = vmxor %vm410, 1
      %vm480 = vmxor %vm411, 1
      %vm481 = vmxor %vm412, 1
      %vm482 = vmxor %vm413, 1
      %vm483 = vmxor %vm414, 1
      %v484 = vsel %vm423, 1, 0
      %v485 = vlaneseq
      %v486 = vshrl.u32 %v485, 7
      %v487 = vsub.s32 0, %v486
      %v488 = vrot.slane %v484, %v487
      %vm489 = vcmp.eq.s32.totalorder %v488, 1
      %vm490 = vmand %vm476, %vm489
      %vm491 = vmand %vm477, %vm489
      %vm492 = vmand %vm478, %vm489
      %vm493 = vmand %vm479, %vm489
      %vm494 = vmand %vm480, %vm489
      %vm495 = vmand %vm481, %vm489
      %vm496 = vmand %vm482, %vm489
      %vm497 = vmand %vm483, %vm489
      %v498 = vpack.c.bf16 %v342, %v339
      %v499 = vpack.c.bf16 %v350, %v347
      %v500 = vpack.c.bf16 %v358, %v355
      %v501 = vpack.c.bf16 %v366, %v363
      %vm502 = vmpackc.low %vm469, %vm468
      %vm503 = vmpackc.low %vm471, %vm470
      %vm504 = vmpackc.low %vm473, %vm472
      %vm505 = vmpackc.low %vm475, %vm474
      %v506 = vsel %vm502, %v498, 2139127680
      %v507 = vsel %vm503, %v499, 2139127680
      %v508 = vsel %vm504, %v500, 2139127680
      %v509 = vsel %vm505, %v501, 2139127680
      %510 = vmin.xlane.bf16.xlu0 %v506
      %v511 = vpop.xlane.xlu0 %510
      %512 = vmin.xlane.bf16.xlu0 %v507
      %v513 = vpop.xlane.xlu0 %512
      %514 = vmin.xlane.bf16.xlu0 %v508
      %v515 = vpop.xlane.xlu0 %514
      %516 = vmin.xlane.bf16.xlu0 %v509
      %v517 = vpop.xlane.xlu0 %516
      %vm518 = vmpackc.low %vm491, %vm490
      %vm519 = vmpackc.low %vm493, %vm492
      %vm520 = vmpackc.low %vm495, %vm494
      %vm521 = vmpackc.low %vm497, %vm496
      %v522 = vsel %vm518, %v498, 4286644096
      %v523 = vsel %vm519, %v499, 4286644096
      %v524 = vsel %vm520, %v500, 4286644096
      %v525 = vsel %vm521, %v501, 4286644096
      %526 = vmax.xlane.bf16.xlu0 %v522
      %v527 = vpop.xlane.xlu0 %526
      %528 = vmax.xlane.bf16.xlu0 %v523
      %v529 = vpop.xlane.xlu0 %528
      %530 = vmax.xlane.bf16.xlu0 %v524
      %v531 = vpop.xlane.xlu0 %530
      %532 = vmax.xlane.bf16.xlu0 %v525
      %v533 = vpop.xlane.xlu0 %532
      %v534 = vadd.bf16 %v498, 1050295962
      %v535 = vadd.bf16 %v499, 1050295962
      %v536 = vadd.bf16 %v500, 1050295962
      %v537 = vadd.bf16 %v501, 1050295962
      %vm538 = vcmp.gt.bf16.partialorder %v534, %v511
      %vm539 = vcmp.gt.bf16.partialorder %v535, %v513
      %vm540 = vcmp.gt.bf16.partialorder %v536, %v515
      %vm541 = vcmp.gt.bf16.partialorder %v537, %v517
      %v542 = vsel %vm538, 65537, 0
      %v543 = vsel %vm539, 65537, 0
      %v544 = vsel %vm540, 65537, 0
      %v545 = vsel %vm541, 65537, 0
      %v546 = vunpack.c.l.b16 %v542
      %v547 = vunpack.c.h.b16 %v542
      %v548 = vunpack.c.l.b16 %v543
      %v549 = vunpack.c.h.b16 %v543
      %v550 = vunpack.c.l.b16 %v544
      %v551 = vunpack.c.h.b16 %v544
      %v552 = vunpack.c.l.b16 %v545
      %v553 = vunpack.c.h.b16 %v545
      %v554 = vpack.c.b16 %v546, %v546
      %v555 = vpack.c.b16 %v547, %v547
      %v556 = vpack.c.b16 %v548, %v548
      %v557 = vpack.c.b16 %v549, %v549
      %v558 = vpack.c.b16 %v550, %v550
      %v559 = vpack.c.b16 %v551, %v551
      %v560 = vpack.c.b16 %v552, %v552
      %v561 = vpack.c.b16 %v553, %v553
      %vm562 = vcmp.ne.s16.totalorder %v554, 0
      %vm563 = vcmp.ne.s16.totalorder %v555, 0
      %vm564 = vcmp.ne.s16.totalorder %v556, 0
      %vm565 = vcmp.ne.s16.totalorder %v557, 0
      %vm566 = vcmp.ne.s16.totalorder %v558, 0
      %vm567 = vcmp.ne.s16.totalorder %v559, 0
      %vm568 = vcmp.ne.s16.totalorder %v560, 0
      %vm569 = vcmp.ne.s16.totalorder %v561, 0
      %v570 = vsel %vm562, 65537, 0
      %v571 = vsel %vm563, 65537, 0
      %v572 = vsel %vm564, 65537, 0
      %v573 = vsel %vm565, 65537, 0
      %v574 = vsel %vm566, 65537, 0
      %v575 = vsel %vm567, 65537, 0
      %v576 = vsel %vm568, 65537, 0
      %v577 = vsel %vm569, 65537, 0
      %v578 = vunpack.c.l.b16 %v570
      %v579 = vunpack.c.l.b16 %v571
      %v580 = vunpack.c.l.b16 %v572
      %v581 = vunpack.c.l.b16 %v573
      %v582 = vunpack.c.l.b16 %v574
      %v583 = vunpack.c.l.b16 %v575
      %v584 = vunpack.c.l.b16 %v576
      %v585 = vunpack.c.l.b16 %v577
      %vm586 = vcmp.ne.s32.totalorder %v578, 0
      %vm587 = vcmp.ne.s32.totalorder %v579, 0
      %vm588 = vcmp.ne.s32.totalorder %v580, 0
      %vm589 = vcmp.ne.s32.totalorder %v581, 0
      %vm590 = vcmp.ne.s32.totalorder %v582, 0
      %vm591 = vcmp.ne.s32.totalorder %v583, 0
      %vm592 = vcmp.ne.s32.totalorder %v584, 0
      %vm593 = vcmp.ne.s32.totalorder %v585, 0
      %vm594 = vmand %vm490, %vm586
      %vm595 = vmand %vm491, %vm587
      %vm596 = vmand %vm492, %vm588
      %vm597 = vmand %vm493, %vm589
      %vm598 = vmand %vm494, %vm590
      %vm599 = vmand %vm495, %vm591
      %vm600 = vmand %vm496, %vm592
      %vm601 = vmand %vm497, %vm593
      %vm602 = vcmp.lt.bf16.partialorder %v498, %v527
      %vm603 = vcmp.lt.bf16.partialorder %v499, %v529
      %vm604 = vcmp.lt.bf16.partialorder %v500, %v531
      %vm605 = vcmp.lt.bf16.partialorder %v501, %v533
      %v606 = vsel %vm602, 65537, 0
      %v607 = vsel %vm603, 65537, 0
      %v608 = vsel %vm604, 65537, 0
      %v609 = vsel %vm605, 65537, 0
      %v610 = vunpack.c.l.b16 %v606
      %v611 = vunpack.c.h.b16 %v606
      %v612 = vunpack.c.l.b16 %v607
      %v613 = vunpack.c.h.b16 %v607
      %v614 = vunpack.c.l.b16 %v608
      %v615 = vunpack.c.h.b16 %v608
      %v616 = vunpack.c.l.b16 %v609
      %v617 = vunpack.c.h.b16 %v609
      %v618 = vpack.c.b16 %v610, %v610
      %v619 = vpack.c.b16 %v611, %v611
      %v620 = vpack.c.b16 %v612, %v612
      %v621 = vpack.c.b16 %v613, %v613
      %v622 = vpack.c.b16 %v614, %v614
      %v623 = vpack.c.b16 %v615, %v615
      %v624 = vpack.c.b16 %v616, %v616
      %v625 = vpack.c.b16 %v617, %v617
      %vm626 = vcmp.ne.s16.totalorder %v618, 0
      %vm627 = vcmp.ne.s16.totalorder %v619, 0
      %vm628 = vcmp.ne.s16.totalorder %v620, 0
      %vm629 = vcmp.ne.s16.totalorder %v621, 0
      %vm630 = vcmp.ne.s16.totalorder %v622, 0
      %vm631 = vcmp.ne.s16.totalorder %v623, 0
      %vm632 = vcmp.ne.s16.totalorder %v624, 0
      %vm633 = vcmp.ne.s16.totalorder %v625, 0
      %v634 = vsel %vm626, 65537, 0
      %v635 = vsel %vm627, 65537, 0
      %v636 = vsel %vm628, 65537, 0
      %v637 = vsel %vm629, 65537, 0
      %v638 = vsel %vm630, 65537, 0
      %v639 = vsel %vm631, 65537, 0
      %v640 = vsel %vm632, 65537, 0
      %v641 = vsel %vm633, 65537, 0
      %v642 = vunpack.c.l.b16 %v634
      %v643 = vunpack.c.l.b16 %v635
      %v644 = vunpack.c.l.b16 %v636
      %v645 = vunpack.c.l.b16 %v637
      %v646 = vunpack.c.l.b16 %v638
      %v647 = vunpack.c.l.b16 %v639
      %v648 = vunpack.c.l.b16 %v640
      %v649 = vunpack.c.l.b16 %v641
      %vm650 = vcmp.ne.s32.totalorder %v642, 0
      %vm651 = vcmp.ne.s32.totalorder %v643, 0
      %vm652 = vcmp.ne.s32.totalorder %v644, 0
      %vm653 = vcmp.ne.s32.totalorder %v645, 0
      %vm654 = vcmp.ne.s32.totalorder %v646, 0
      %vm655 = vcmp.ne.s32.totalorder %v647, 0
      %vm656 = vcmp.ne.s32.totalorder %v648, 0
      %vm657 = vcmp.ne.s32.totalorder %v649, 0
      %vm658 = vmand %vm468, %vm650
      %vm659 = vmand %vm469, %vm651
      %vm660 = vmand %vm470, %vm652
      %vm661 = vmand %vm471, %vm653
      %vm662 = vmand %vm472, %vm654
      %vm663 = vmand %vm473, %vm655
      %vm664 = vmand %vm474, %vm656
      %vm665 = vmand %vm475, %vm657
      %v666 = vsub.bf16 %v498, 1056980736
      %v667 = vsub.bf16 %v499, 1056980736
      %v668 = vsub.bf16 %v500, 1056980736
      %v669 = vsub.bf16 %v501, 1056980736
      %v670 = vmul.bf16 %v666, 3192766029
      %v671 = vmul.bf16 %v667, 3192766029
      %v672 = vmul.bf16 %v668, 3192766029
      %v673 = vmul.bf16 %v669, 3192766029
      %v675 = vmul.bf16 %v670, 1069105081
      %v676 = vpow.bf16.pop %v675
      %v678 = vmul.bf16 %v671, 1069105081
      %v679 = vpow.bf16.pop %v678
      %v681 = vmul.bf16 %v672, 1069105081
      %v682 = vpow.bf16.pop %v681
      %v684 = vmul.bf16 %v673, 1069105081
      %v685 = vpow.bf16.pop %v684
      %vm686 = vmpackc.low %vm659, %vm658
      %vm687 = vmpackc.low %vm661, %vm660
      %vm688 = vmpackc.low %vm663, %vm662
      %vm689 = vmpackc.low %vm665, %vm664
      %v690 = vsel %vm686, %v676, 0
      %v691 = vsel %vm687, %v679, 0
      %v692 = vsel %vm688, %v682, 0
      %v693 = vsel %vm689, %v685, 0
      %v694 = vmul.bf16 %v666, 1109410336
      %v695 = vmul.bf16 %v667, 1109410336
      %v696 = vmul.bf16 %v668, 1109410336
      %v697 = vmul.bf16 %v669, 1109410336
      %v699 = vmul.bf16 %v694, 1069105081
      %v700 = vpow.bf16.pop %v699
      %v702 = vmul.bf16 %v695, 1069105081
      %v703 = vpow.bf16.pop %v702
      %v705 = vmul.bf16 %v696, 1069105081
      %v706 = vpow.bf16.pop %v705
      %v708 = vmul.bf16 %v697, 1069105081
      %v709 = vpow.bf16.pop %v708
      %vm710 = vmpackc.low %vm595, %vm594
      %vm711 = vmpackc.low %vm597, %vm596
      %vm712 = vmpackc.low %vm599, %vm598
      %vm713 = vmpackc.low %vm601, %vm600
      %v714 = vsel %vm710, %v700, 0
      %v715 = vsel %vm711, %v703, 0
      %v716 = vsel %vm712, %v706, 0
      %v717 = vsel %vm713, %v709, 0
      %v718 = vunpack.c.l.bf16 %v690
      %v719 = vunpack.c.h.bf16 %v690
      %v720 = vunpack.c.l.bf16 %v691
      %v721 = vunpack.c.h.bf16 %v691
      %v722 = vunpack.c.l.bf16 %v692
      %v723 = vunpack.c.h.bf16 %v692
      %v724 = vunpack.c.l.bf16 %v693
      %v725 = vunpack.c.h.bf16 %v693
      %726 = vadd.xlane.f32.xlu0 %v718
      %v727 = vpop.xlane.xlu0 %726
      %728 = vadd.xlane.f32.xlu0 %v719
      %v729 = vpop.xlane.xlu0 %728
      %730 = vadd.xlane.f32.xlu0 %v720
      %v731 = vpop.xlane.xlu0 %730
      %732 = vadd.xlane.f32.xlu0 %v721
      %v733 = vpop.xlane.xlu0 %732
      %734 = vadd.xlane.f32.xlu0 %v722
      %v735 = vpop.xlane.xlu0 %734
      %736 = vadd.xlane.f32.xlu0 %v723
      %v737 = vpop.xlane.xlu0 %736
      %738 = vadd.xlane.f32.xlu0 %v724
      %v739 = vpop.xlane.xlu0 %738
      %740 = vadd.xlane.f32.xlu0 %v725
      %v741 = vpop.xlane.xlu0 %740
      %v742 = vunpack.c.l.bf16 %v714
      %v743 = vunpack.c.h.bf16 %v714
      %v744 = vunpack.c.l.bf16 %v715
      %v745 = vunpack.c.h.bf16 %v715
      %v746 = vunpack.c.l.bf16 %v716
      %v747 = vunpack.c.h.bf16 %v716
      %v748 = vunpack.c.l.bf16 %v717
      %v749 = vunpack.c.h.bf16 %v717
      %750 = vadd.xlane.f32.xlu0 %v742
      %v751 = vpop.xlane.xlu0 %750
      %752 = vadd.xlane.f32.xlu0 %v743
      %v753 = vpop.xlane.xlu0 %752
      %754 = vadd.xlane.f32.xlu0 %v744
      %v755 = vpop.xlane.xlu0 %754
      %756 = vadd.xlane.f32.xlu0 %v745
      %v757 = vpop.xlane.xlu0 %756
      %758 = vadd.xlane.f32.xlu0 %v746
      %v759 = vpop.xlane.xlu0 %758
      %760 = vadd.xlane.f32.xlu0 %v747
      %v761 = vpop.xlane.xlu0 %760
      %762 = vadd.xlane.f32.xlu0 %v748
      %v763 = vpop.xlane.xlu0 %762
      %764 = vadd.xlane.f32.xlu0 %v749
      %v765 = vpop.xlane.xlu0 %764
      %vm766 = vcmp.gt.f32.partialorder %v727, 0.0
      %vm767 = vcmp.gt.f32.partialorder %v729, 0.0
      %vm768 = vcmp.gt.f32.partialorder %v731, 0.0
      %vm769 = vcmp.gt.f32.partialorder %v733, 0.0
      %vm770 = vcmp.gt.f32.partialorder %v735, 0.0
      %vm771 = vcmp.gt.f32.partialorder %v737, 0.0
      %vm772 = vcmp.gt.f32.partialorder %v739, 0.0
      %vm773 = vcmp.gt.f32.partialorder %v741, 0.0
      %vm774 = vcmp.gt.f32.partialorder %v751, 0.0
      %vm775 = vcmp.gt.f32.partialorder %v753, 0.0
      %vm776 = vcmp.gt.f32.partialorder %v755, 0.0
      %vm777 = vcmp.gt.f32.partialorder %v757, 0.0
      %vm778 = vcmp.gt.f32.partialorder %v759, 0.0
      %vm779 = vcmp.gt.f32.partialorder %v761, 0.0
      %vm780 = vcmp.gt.f32.partialorder %v763, 0.0
      %vm781 = vcmp.gt.f32.partialorder %v765, 0.0
      %vm782 = vmand %vm766, %vm774
      %vm783 = vmand %vm767, %vm775
      %vm784 = vmand %vm768, %vm776
      %vm785 = vmand %vm769, %vm777
      %vm786 = vmand %vm770, %vm778
      %vm787 = vmand %vm771, %vm779
      %vm788 = vmand %vm772, %vm780
      %vm789 = vmand %vm773, %vm781
      %vm790 = vmand %vm782, %vm415
      %vm791 = vmand %vm783, %vm416
      %vm792 = vmand %vm784, %vm417
      %vm793 = vmand %vm785, %vm418
      %vm794 = vmand %vm786, %vm419
      %vm795 = vmand %vm787, %vm420
      %vm796 = vmand %vm788, %vm421
      %vm797 = vmand %vm789, %vm422
      %v798 = vadd.f32 %v727, 1.0
      %v799 = vadd.f32 %v729, 1.0
      %v800 = vadd.f32 %v731, 1.0
      %v801 = vadd.f32 %v733, 1.0
      %v802 = vadd.f32 %v735, 1.0
      %v803 = vadd.f32 %v737, 1.0
      %v804 = vadd.f32 %v739, 1.0
      %v805 = vadd.f32 %v741, 1.0
      %v806 = vlog2.pop %v798
      %v807 = vmul.f32 %v806, 0.6931472
      %v808 = vlog2.pop %v799
      %v809 = vmul.f32 %v808, 0.6931472
      %v810 = vlog2.pop %v800
      %v811 = vmul.f32 %v810, 0.6931472
      %v812 = vlog2.pop %v801
      %v813 = vmul.f32 %v812, 0.6931472
      %v814 = vlog2.pop %v802
      %v815 = vmul.f32 %v814, 0.6931472
      %v816 = vlog2.pop %v803
      %v817 = vmul.f32 %v816, 0.6931472
      %v818 = vlog2.pop %v804
      %v819 = vmul.f32 %v818, 0.6931472
      %v820 = vlog2.pop %v805
      %v821 = vmul.f32 %v820, 0.6931472
      %v822 = vmul.f32 %v807, 5.0
      %v823 = vmul.f32 %v809, 5.0
      %v824 = vmul.f32 %v811, 5.0
      %v825 = vmul.f32 %v813, 5.0
      %v826 = vmul.f32 %v815, 5.0
      %v827 = vmul.f32 %v817, 5.0
      %v828 = vmul.f32 %v819, 5.0
      %v829 = vmul.f32 %v821, 5.0
      %v830 = vadd.f32 %v751, 1.0
      %v831 = vadd.f32 %v753, 1.0
      %v832 = vadd.f32 %v755, 1.0
      %v833 = vadd.f32 %v757, 1.0
      %v834 = vadd.f32 %v759, 1.0
      %v835 = vadd.f32 %v761, 1.0
      %v836 = vadd.f32 %v763, 1.0
      %v837 = vadd.f32 %v765, 1.0
      %v838 = vlog2.pop %v830
      %v839 = vmul.f32 %v838, 0.6931472
      %v840 = vlog2.pop %v831
      %v841 = vmul.f32 %v840, 0.6931472
      %v842 = vlog2.pop %v832
      %v843 = vmul.f32 %v842, 0.6931472
      %v844 = vlog2.pop %v833
      %v845 = vmul.f32 %v844, 0.6931472
      %v846 = vlog2.pop %v834
      %v847 = vmul.f32 %v846, 0.6931472
      %v848 = vlog2.pop %v835
      %v849 = vmul.f32 %v848, 0.6931472
      %v850 = vlog2.pop %v836
      %v851 = vmul.f32 %v850, 0.6931472
      %v852 = vlog2.pop %v837
      %v853 = vmul.f32 %v852, 0.6931472
      %v854 = vmul.f32 %v839, 0.025
      %v855 = vmul.f32 %v841, 0.025
      %v856 = vmul.f32 %v843, 0.025
      %v857 = vmul.f32 %v845, 0.025
      %v858 = vmul.f32 %v847, 0.025
      %v859 = vmul.f32 %v849, 0.025
      %v860 = vmul.f32 %v851, 0.025
      %v861 = vmul.f32 %v853, 0.025
      %v862 = vadd.f32 %v822, %v854
      %v863 = vadd.f32 %v823, %v855
      %v864 = vadd.f32 %v824, %v856
      %v865 = vadd.f32 %v825, %v857
      %v866 = vadd.f32 %v826, %v858
      %v867 = vadd.f32 %v827, %v859
      %v868 = vadd.f32 %v828, %v860
      %v869 = vadd.f32 %v829, %v861
      %v870 = vsel %vm790, %v862, 0.0
      %v871 = vsel %vm791, %v863, 0.0
      %v872 = vsel %vm792, %v864, 0.0
      %v873 = vsel %vm793, %v865, 0.0
      %v874 = vsel %vm794, %v866, 0.0
      %v875 = vsel %vm795, %v867, 0.0
      %v876 = vsel %vm796, %v868, 0.0
      %v877 = vsel %vm797, %v869, 0.0
      %vm878 = vcmask 7168
      %v879 = vsel %vm878, %v870, 0.0
      %v880 = vsel %vm878, %v871, 0.0
      %v881 = vadd.f32 %v879, %v880
      %v882 = vsel %vm878, %v872, 0.0
      %v883 = vadd.f32 %v881, %v882
      %v884 = vsel %vm878, %v873, 0.0
      %v885 = vadd.f32 %v883, %v884
      %v886 = vsel %vm878, %v874, 0.0
      %v887 = vadd.f32 %v885, %v886
      %v888 = vsel %vm878, %v875, 0.0
      %v889 = vadd.f32 %v887, %v888
      %v890 = vsel %vm878, %v876, 0.0
      %v891 = vadd.f32 %v889, %v890
      %v892 = vsel %vm878, %v877, 0.0
      %v893 = vadd.f32 %v891, %v892
      %894 = vadd.xlane.f32.xlu0 %v893
      %v895 = vpop.xlane.xlu0 %894
      %v896 = vrot.slane %v895, 4
      %v897 = vadd.f32 %v895, %v896
      %v898 = vrot.slane %v897, 2
      %v899 = vadd.f32 %v897, %v898
      %v900 = vrot.slane %v899, 1
      %v901 = vadd.f32 %v899, %v900
      %s902 = vtos %v901
      %vm903 = vmxor %vm790, 1
      %vm904 = vmxor %vm791, 1
      %vm905 = vmxor %vm792, 1
      %vm906 = vmxor %vm793, 1
      %vm907 = vmxor %vm794, 1
      %vm908 = vmxor %vm795, 1
      %vm909 = vmxor %vm796, 1
      %vm910 = vmxor %vm797, 1
      %vm911 = vmand %vm415, %vm903
      %vm912 = vmand %vm416, %vm904
      %vm913 = vmand %vm417, %vm905
      %vm914 = vmand %vm418, %vm906
      %vm915 = vmand %vm419, %vm907
      %vm916 = vmand %vm420, %vm908
      %vm917 = vmand %vm421, %vm909
      %vm918 = vmand %vm422, %vm910
      %v919 = vsel %vm911, 1.0, 0.0
      %v920 = vsel %vm912, 1.0, 0.0
      %v921 = vsel %vm913, 1.0, 0.0
      %v922 = vsel %vm914, 1.0, 0.0
      %v923 = vsel %vm915, 1.0, 0.0
      %v924 = vsel %vm916, 1.0, 0.0
      %v925 = vsel %vm917, 1.0, 0.0
      %v926 = vsel %vm918, 1.0, 0.0
      %v927 = vsel %vm878, %v919, 0.0
      %v928 = vsel %vm878, %v920, 0.0
      %v929 = vadd.f32 %v927, %v928
      %v930 = vsel %vm878, %v921, 0.0
      %v931 = vadd.f32 %v929, %v930
      %v932 = vsel %vm878, %v922, 0.0
      %v933 = vadd.f32 %v931, %v932
      %v934 = vsel %vm878, %v923, 0.0
      %v935 = vadd.f32 %v933, %v934
      %v936 = vsel %vm878, %v924, 0.0
      %v937 = vadd.f32 %v935, %v936
      %v938 = vsel %vm878, %v925, 0.0
      %v939 = vadd.f32 %v937, %v938
      %v940 = vsel %vm878, %v926, 0.0
      %v941 = vadd.f32 %v939, %v940
      %942 = vadd.xlane.f32.xlu0 %v941
      %v943 = vpop.xlane.xlu0 %942
      %v944 = vrot.slane %v943, 4
      %v945 = vadd.f32 %v943, %v944
      %v946 = vrot.slane %v945, 2
      %v947 = vadd.f32 %v945, %v946
      %v948 = vrot.slane %v947, 1
      %v949 = vadd.f32 %v947, %v948
      %s950 = vtos %v949
      %vm951 = vcmp.eq.s32.totalorder %v425, 0
      %v952 = vstv %s902
      %vm953 = vcmp.eq.s32.totalorder %v425, 1
      %v954 = vstv %s950
      %v955 = vsel %vm953, %v954, 0.0
      %v956 = vsel %vm951, %v952, %v955
      %957 = vst [vmem:[%s197] sm:$0xff] %v956
      %p958 = scmp.lt.s32.totalorder %s15, 1
      %s959 = scalar_select %p958, %s15, 1
      %s960 = smul.addr %s959, 8
      %s961 = scalar_lea.vmem %s4, %s960
      // Predicated region
      $region37: #{_ms_loss_impl.1} parent=35 // pred_check
        %p962 = pneg %p122
      $region38: #{_ms_loss_impl.1} parent=35 // pred_check_branch
        %964 = sbr.rel (%p962) target = $region40
      $region39: #{_ms_loss_impl.1} parent=35 // pred_region
        _
      $region40: #{_ms_loss_impl.1} parent=35 // pred_fallthru
        _
    $region36: #{_ms_loss_impl.1} parent=5 // pred_fallthru
      _
    %p965 = scmp.le.s32.totalorder 2, %s10
    // Predicated region
    $region41: #{_ms_loss_impl.1} parent=5 // pred_check
      %p966 = pneg %p965
    $region42: #{_ms_loss_impl.1} parent=5 // pred_check_branch
      %968 = sbr.rel (%p966) target = $region44
    $region43: #{_ms_loss_impl.1} parent=5 // pred_region
      %s969 = ssub.s32 %s10, 2
      // Predicated region
      $region45: #{_ms_loss_impl.1} parent=43 // pred_check
        %p970 = pneg %p128
      $region46: #{_ms_loss_impl.1} parent=43 // pred_check_branch
        %972 = sbr.rel (%p970) target = $region48
      $region47: #{_ms_loss_impl.1} parent=43 // pred_region
        %p973 = scmp.lt.s32.totalorder %s16, 1
        %s974 = scalar_select %p973, %s16, 1
        %s975 = smul.addr %s974, 8
        %s976 = scalar_lea.vmem %s4, %s975
      $region48: #{_ms_loss_impl.1} parent=43 // pred_fallthru
        _
    $region44: #{_ms_loss_impl.1} parent=5 // pred_fallthru
      _
  $region6: #{_ms_loss_impl.1} parent=0 // loop_footer
    %s14 = sadd.s32 1, %s10
  $region7: #{_ms_loss_impl.1} parent=0 // loop_footer_branch
    %9 = sbr.rel target = $region3
  $region8: #{_ms_loss_impl.1} parent=0 // loop_exit
    _

</llo_original>
